<compile_context>
chip_gen: v6e
topology: v6e:2x2x1
jax: 0.10.0
libtpu: 0.0.40
codegen_flags: <defaults>
</compile_context>

<pallas_src>
import functools

import jax
import jax.numpy as jnp
import numpy as np
from jax.experimental import pallas as pl
from jax.experimental.pallas import tpu as pltpu


# ----------------------------- Pallas kernels ------------------------------


def _conv1_qkv_kernel(x_ref, w1_ref, b1_ref, wqkv_ref, qkv_ref):
    """conv1(+bn1 scale folded)+ReLU, then fused q|k|v projection. bf16 MXU, f32 acc."""
    x = x_ref[...].astype(jnp.bfloat16)
    h = jnp.dot(x, w1_ref[...], preferred_element_type=jnp.float32) + b1_ref[...]
    h = jnp.maximum(h, 0.0).astype(jnp.bfloat16)
    qkv_ref[...] = jnp.dot(
        h, wqkv_ref[...], preferred_element_type=jnp.float32
    ).astype(qkv_ref.dtype)


def conv1_qkv(xf, w1, b1, wqkv, *, row_tile):
    P, cin = xf.shape
    width = w1.shape[1]
    ctot = wqkv.shape[1]
    assert P % row_tile == 0
    return pl.pallas_call(
        _conv1_qkv_kernel,
        out_shape=jax.ShapeDtypeStruct((P, ctot), jnp.bfloat16),
        grid_spec=pltpu.PrefetchScalarGridSpec(
            num_scalar_prefetch=0,
            grid=(P // row_tile,),
            in_specs=[
                pl.BlockSpec((row_tile, cin), lambda i: (i, 0)),
                pl.BlockSpec((cin, width), lambda i: (0, 0)),
                pl.BlockSpec((1, width), lambda i: (0, 0)),
                pl.BlockSpec((width, ctot), lambda i: (0, 0)),
            ],
            out_specs=pl.BlockSpec((row_tile, ctot), lambda i: (i, 0)),
        ),
        compiler_params=pltpu.CompilerParams(dimension_semantics=("parallel",)),
    )(xf, w1, b1.reshape(1, width), wqkv)


def _attn_tail_kernel(q_ref, kp_ref, vp_ref, xid_ref, sgb_ref, sh2_ref,
                      w3_ref, b3_ref, o_ref, *, H, W, ksz, dil):
    """Local-window grouped attention (in-kernel halo gather, online softmax)
    + BN2 shift + ReLU + conv3(+BN3 scale folded) + BN3 shift + residual + ReLU.

    One grid step = one batch image.  All working arrays are (H*W, C) so the
    lane (last) dim stays channel-dense; per-head logits are broadcast to the
    head's channels via a 0/1 indicator matmul (MXU) instead of skinny (.,G)
    arrays + cross-lane reduces.
    """
    HW = H * W
    cv = vp_ref.shape[-1]

    qf = q_ref[...].astype(jnp.float32)       # (HW, cq); 1/sqrt(dq) folded into wq
    sgb = sgb_ref[...]                        # (cq, cv) bf16 0/1 same-head indicator

    def shifted(ref, di, dj):
        # (H, W, C) halo window -> (HW, C).  W % 8 == 0 keeps this tile-aligned.
        return ref[di:di + H, dj:dj + W, :].reshape(HW, ref.shape[-1])

    offs = [(i * dil, j * dil) for i in range(ksz) for j in range(ksz)]

    # --- online softmax over the ksz*ksz window (flash-attention style) ---
    di, dj = offs[0]
    prod = (qf * shifted(kp_ref, di, dj)).astype(jnp.bfloat16)
    m = jnp.dot(prod, sgb, preferred_element_type=jnp.float32)   # per-head logit, broadcast to cv
    l = jnp.ones((HW, cv), jnp.float32)
    acc = shifted(vp_ref, di, dj)                                 # p0 = exp(0) = 1

    for di, dj in offs[1:]:
        prod = (qf * shifted(kp_ref, di, dj)).astype(jnp.bfloat16)
        lg = jnp.dot(prod, sgb, preferred_element_type=jnp.float32)
        m_new = jnp.maximum(m, lg)
        alpha = jnp.exp(m - m_new)
        p = jnp.exp(lg - m_new)
        l = l * alpha + p
        acc = acc * alpha + p * shifted(vp_ref, di, dj)
        m = m_new

    # bn2 scale is folded into wv, so only the shift remains here.
    attn = acc * pl.reciprocal(l, approx=True)                    # (HW, cv)
    h2 = jnp.maximum(attn + sh2_ref[...], 0.0).astype(jnp.bfloat16)

    y = jnp.dot(h2, w3_ref[...], preferred_element_type=jnp.float32)
    y = y + b3_ref[...] + xid_ref[...]
    o_ref[...] = jnp.maximum(y, 0.0).astype(o_ref.dtype)


def attn_bn_conv3_residual(q, kpad, vpad, xid, sgb, sh2, w3, b3, *, H, W, ksz, dil):
    B, Hp, Wp, cq = kpad.shape
    cv = vpad.shape[-1]
    P, cin = xid.shape
    cout = w3.shape[1]
    HW = H * W
    kern = functools.partial(_attn_tail_kernel, H=H, W=W, ksz=ksz, dil=dil)
    return pl.pallas_call(
        kern,
        out_shape=jax.ShapeDtypeStruct((P, cout), jnp.float32),
        grid_spec=pltpu.PrefetchScalarGridSpec(
            num_scalar_prefetch=0,
            grid=(B,),
            in_specs=[
                pl.BlockSpec((HW, cq), lambda b: (b, 0)),
                pl.BlockSpec((None, Hp, Wp, cq), lambda b: (b, 0, 0, 0)),
                pl.BlockSpec((None, Hp, Wp, cv), lambda b: (b, 0, 0, 0)),
                pl.BlockSpec((HW, cin), lambda b: (b, 0)),
                pl.BlockSpec((cq, cv), lambda b: (0, 0)),
                pl.BlockSpec((1, cv), lambda b: (0, 0)),
                pl.BlockSpec((cv, cout), lambda b: (0, 0)),
                pl.BlockSpec((1, cout), lambda b: (0, 0)),
            ],
            out_specs=pl.BlockSpec((HW, cout), lambda b: (b, 0)),
        ),
        compiler_params=pltpu.CompilerParams(dimension_semantics=("parallel",)),
    )(q, kpad, vpad, xid, sgb, sh2.reshape(1, cv), w3, b3.reshape(1, cout))


# ------------------------------ JAX glue ------------------------------------


def fold_bn(gamma, beta, mean, var, eps=1e-5):
    scale = gamma / jnp.sqrt(var + eps)
    shift = beta - mean * scale
    return scale, shift


def stra_bottleneck_forward(x_nchw, params, *, groups=8, kernel_size=3,
                            dilation=1, row_tile=512):
    B, cin, H, W = x_nchw.shape
    assert W % 8 == 0 and (H * W) % 8 == 0  # keeps in-kernel window reshape tile-aligned
    P = B * H * W
    xf = jnp.transpose(x_nchw, (0, 2, 3, 1)).reshape(P, cin)     # NCHW -> (P, C)

    width = params["w1"].shape[1]
    cq = params["wq"].shape[1]
    cv = params["wv"].shape[1]
    cout = params["w3"].shape[1]
    G = groups
    dq, dv = cq // G, cv // G

    s1, b1 = fold_bn(*params["bn1"])
    s2, b2 = fold_bn(*params["bn2"])
    s3, b3 = fold_bn(*params["bn3"])

    # Fold BN scales (and the 1/sqrt(dq) attention scale) into weight columns;
    # cast weights to bf16 -> single-pass MXU, f32 accumulation inside kernels.
    w1f = (params["w1"] * s1[None, :]).astype(jnp.bfloat16)
    wqf = params["wq"] * (1.0 / np.sqrt(dq))
    wvf = params["wv"] * s2[None, :]   # bn2 scale commutes with the value-weighted sum
    wqkv = jnp.concatenate([wqf, params["wk"], wvf], axis=1).astype(jnp.bfloat16)
    w3f = (params["w3"] * s3[None, :]).astype(jnp.bfloat16)

    # Kernel A: conv1+bn1+relu + fused q/k/v projection (h1 never leaves VMEM).
    rt = min(row_tile, P)
    while P % rt:
        rt -= 8
    qkv = conv1_qkv(xf, w1f, b1, wqkv, row_tile=rt)              # (P, 2*cq+cv) bf16

    q = qkv[:, :cq]
    # k/v go into spatially padded f32 buffers so the in-kernel halo slices stay
    # on the 32-bit sublane path (bf16 packs 2 rows/sublane; offset-1 window
    # slices of packed data would force relayouts).  These tensors are tiny.
    pad = dilation * (kernel_size // 2)
    k = qkv[:, cq:2 * cq].astype(jnp.float32).reshape(B, H, W, cq)
    v = qkv[:, 2 * cq:].astype(jnp.float32).reshape(B, H, W, cv)
    kpad = jnp.pad(k, ((0, 0), (pad, pad), (pad, pad), (0, 0)))
    vpad = jnp.pad(v, ((0, 0), (pad, pad), (pad, pad), (0, 0)))

    # 0/1 indicator: q-channel c and v-channel c' belong to the same head.
    sgb = (jnp.arange(cq)[:, None] // dq
           == jnp.arange(cv)[None, :] // dv).astype(jnp.bfloat16)

    # Kernel B: attention + bn2 + relu + conv3 + bn3 + residual + relu.
    out = attn_bn_conv3_residual(q, kpad, vpad, xf, sgb, b2, w3f, b3,
                                 H=H, W=W, ksz=kernel_size, dil=dilation)
    return out.reshape(B, H, W, cout).transpose(0, 3, 1, 2)      # back to NCHW


# ------------------------- pure-JAX reference --------------------------------


def extract_patches(x_nhwc, k, dilation):
    """im2col for the kxk local attention window (stride 1, zero padding). Reference only."""
    B, H, W, C = x_nhwc.shape
    pad = dilation * (k // 2)
    xp = jnp.pad(x_nhwc, ((0, 0), (pad, pad), (pad, pad), (0, 0)))
    pats = []
    for i in range(k):
        for j in range(k):
            pats.append(xp[:, i * dilation:i * dilation + H,
                           j * dilation:j * dilation + W, :])
    return jnp.stack(pats, axis=3)  # (B, H, W, k*k, C)


def reference_forward(x_nchw, params, *, groups=8, kernel_size=3, dilation=1):
    B, cin, H, W = x_nchw.shape
    P = B * H * W
    xf = jnp.transpose(x_nchw, (0, 2, 3, 1)).reshape(P, cin)

    def bnf(h, bnp):
        s, b = fold_bn(*bnp)
        return h * s + b

    h1 = jax.nn.relu(bnf(xf @ params["w1"], params["bn1"]))
    q = h1 @ params["wq"]
    k = h1 @ params["wk"]
    v = h1 @ params["wv"]
    cq, cv = q.shape[1], v.shape[1]
    G = groups
    dq, dv = cq // G, cv // G
    kk = kernel_size * kernel_size
    kp = extract_patches(k.reshape(B, H, W, cq), kernel_size, dilation).reshape(P, kk, G, dq)
    vp = extract_patches(v.reshape(B, H, W, cv), kernel_size, dilation).reshape(P, kk, G, dv)
    qg = q.reshape(P, G, dq)
    logits = jnp.einsum("pgd,pkgd->pgk", qg, kp) / jnp.sqrt(jnp.float32(dq))
    a = jax.nn.softmax(logits, axis=-1)
    attn = jnp.einsum("pgk,pkgd->pgd", a, vp).reshape(P, cv)
    h2 = jax.nn.relu(bnf(attn, params["bn2"]))
    y = jax.nn.relu(bnf(h2 @ params["w3"], params["bn3"]) + xf)
    cout = params["w3"].shape[1]
    return y.reshape(B, H, W, cout).transpose(0, 3, 1, 2)


# ---------------------------- parameter init ---------------------------------


def init_params(key, inplanes, planes, *, rate=1, base_width=64, expansion=4):
    width = int(planes * (base_width / 64.0))
    cq = width // rate
    ks = jax.random.split(key, 8)

    def w(k, ci, co):
        return jax.random.normal(k, (ci, co), jnp.float32) / jnp.sqrt(jnp.float32(ci))

    def bn(k, c):
        k1, k2, k3, k4 = jax.random.split(k, 4)
        gamma = 1.0 + 0.1 * jax.random.normal(k1, (c,), jnp.float32)
        beta = 0.1 * jax.random.normal(k2, (c,), jnp.float32)
        mean = 0.1 * jax.random.normal(k3, (c,), jnp.float32)
        var = jnp.abs(1.0 + 0.1 * jax.random.normal(k4, (c,), jnp.float32))
        return (gamma, beta, mean, var)

    return dict(
        w1=w(ks[0], inplanes, width),
        bn1=bn(ks[1], width),
        wq=w(ks[2], width, cq),
        wk=w(ks[3], width, cq),
        wv=w(ks[4], width, width),
        bn2=bn(ks[5], width),
        w3=w(ks[6], width, planes * expansion),
        bn3=bn(ks[7], planes * expansion),
    )


# --------------------------------- main ---------------------------------------


if __name__ == "__main__":
    key = jax.random.PRNGKey(0)
    kx, kw = jax.random.split(key)

    # inplanes == expansion*planes so the identity shortcut is valid
    # (stride=1, downsample=None).  width=64, cq=cv=64, groups=8 -> dq=dv=8.
    B, inplanes, H, W = 2, 256, 16, 16
    planes, groups, kernel_size, rate = 64, 8, 3, 1

    x = jax.random.normal(kx, (B, inplanes, H, W), jnp.float32)
    params = init_params(kw, inplanes, planes, rate=rate)

    # row_tile=256 -> kernel A runs 2 "parallel" grid steps at this toy size so
    # both v7x TensorCores get work; at production sizes use the 512 default.
    out = stra_bottleneck_forward(x, params, groups=groups,
                                  kernel_size=kernel_size, row_tile=256)
    out = jax.block_until_ready(out)

    ref = reference_forward(x, params, groups=groups, kernel_size=kernel_size)
    assert out.shape == (B, planes * 4, H, W)

    out_np, ref_np = np.asarray(out), np.asarray(ref)
    # bf16-MXU kernel vs f32 reference: loose elementwise sanity bound plus a
    # tight relative-energy check (typical per-element error ~1e-2).
    np.testing.assert_allclose(out_np, ref_np, rtol=1e-1, atol=1e-1)
    rel = np.linalg.norm(out_np - ref_np) / (np.linalg.norm(ref_np) + 1e-12)
    assert rel < 2.5e-2, f"relative error too large: {rel}"

    print("KERNEL_OK")
</pallas_src>

<mosaic_0001>
module attributes {stable_mosaic.version = 11 : i64} {
  func.func @_conv1_qkv_kernel(%arg0: i32, %arg1: memref<256x256xf32, #tpu.memory_space<vmem>>, %arg2: memref<256x64xbf16, #tpu.memory_space<vmem>>, %arg3: memref<1x64xf32, #tpu.memory_space<vmem>>, %arg4: memref<64x192xbf16, #tpu.memory_space<vmem>>, %arg5: memref<256x192xbf16, #tpu.memory_space<vmem>>) attributes {dimension_semantics = [#tpu.dimension_semantics<parallel>], iteration_bounds = array<i64: 2>, scalar_prefetch = 0 : i64, scratch_operands = 0 : i64, tpu.core_type = #tpu.core_type<tc>, window_params = [{transform_indices = @transform_0, window_bounds = array<i64: 256, 256>}, {pipeline_mode = #tpu.pipeline_mode<synchronous>, transform_indices = @transform_1, window_bounds = array<i64: 256, 64>}, {pipeline_mode = #tpu.pipeline_mode<synchronous>, transform_indices = @transform_2, window_bounds = array<i64: 1, 64>}, {pipeline_mode = #tpu.pipeline_mode<synchronous>, transform_indices = @transform_3, window_bounds = array<i64: 64, 192>}, {transform_indices = @transform_4, window_bounds = array<i64: 256, 192>}]} {
    %c0 = arith.constant 0 : index
    %c0_0 = arith.constant 0 : index
    %0 = vector.load %arg1[%c0, %c0_0] : memref<256x256xf32, #tpu.memory_space<vmem>>, vector<256x256xf32>
    %1 = arith.truncf %0 : vector<256x256xf32> to vector<256x256xbf16>
    %c0_1 = arith.constant 0 : index
    %c0_2 = arith.constant 0 : index
    %2 = vector.load %arg2[%c0_1, %c0_2] : memref<256x64xbf16, #tpu.memory_space<vmem>>, vector<256x64xbf16>
    %cst = arith.constant dense<0.000000e+00> : vector<256x64xf32>
    %3 = tpu.matmul %1, %2, %cst {dimension_numbers = #tpu.dot_dimension_numbers<[1], [0], [0], [1], [0, 0, 1, 1], [], []>} : vector<256x256xbf16>, vector<256x64xbf16>, vector<256x64xf32> -> vector<256x64xf32>
    %c0_3 = arith.constant 0 : index
    %c0_4 = arith.constant 0 : index
    %4 = vector.load %arg3[%c0_3, %c0_4] : memref<1x64xf32, #tpu.memory_space<vmem>>, vector<1x64xf32>
    %5 = vector.broadcast %4 : vector<1x64xf32> to vector<256x64xf32>
    %6 = arith.addf %3, %5 : vector<256x64xf32>
    %cst_5 = arith.constant 0.000000e+00 : f32
    %7 = vector.broadcast %cst_5 : f32 to vector<256x64xf32>
    %8 = arith.maximumf %6, %7 : vector<256x64xf32>
    %9 = arith.truncf %8 : vector<256x64xf32> to vector<256x64xbf16>
    %c0_6 = arith.constant 0 : index
    %c0_7 = arith.constant 0 : index
    %10 = vector.load %arg4[%c0_6, %c0_7] : memref<64x192xbf16, #tpu.memory_space<vmem>>, vector<64x192xbf16>
    %cst_8 = arith.constant dense<0.000000e+00> : vector<256x192xf32>
    %11 = tpu.matmul %9, %10, %cst_8 {dimension_numbers = #tpu.dot_dimension_numbers<[1], [0], [0], [1], [0, 0, 1, 1], [], []>} : vector<256x64xbf16>, vector<64x192xbf16>, vector<256x192xf32> -> vector<256x192xf32>
    %12 = arith.truncf %11 : vector<256x192xf32> to vector<256x192xbf16>
    %c0_9 = arith.constant 0 : index
    %c0_10 = arith.constant 0 : index
    %13 = vector.load %arg5[%c0_9, %c0_10] : memref<256x192xbf16, #tpu.memory_space<vmem>>, vector<256x192xbf16>
    tpu.vector_store %arg5[%c0_9, %c0_10], %12 {strides = array<i32>} : memref<256x192xbf16, #tpu.memory_space<vmem>>, vector<256x192xbf16>,
    return
  }
  func.func @transform_0(%arg0: i32) -> (i32, i32) {
    %c0_i32 = arith.constant 0 : i32
    %c0_i32_0 = arith.constant 0 : i32
    return %arg0, %c0_i32 : i32, i32
  }
  func.func @transform_1(%arg0: i32) -> (i32, i32) {
    %c0_i32 = arith.constant 0 : i32
    %c0_i32_0 = arith.constant 0 : i32
    %c0_i32_1 = arith.constant 0 : i32
    return %c0_i32, %c0_i32_0 : i32, i32
  }
  func.func @transform_2(%arg0: i32) -> (i32, i32) {
    %c0_i32 = arith.constant 0 : i32
    %c0_i32_0 = arith.constant 0 : i32
    %c0_i32_1 = arith.constant 0 : i32
    return %c0_i32, %c0_i32_0 : i32, i32
  }
  func.func @transform_3(%arg0: i32) -> (i32, i32) {
    %c0_i32 = arith.constant 0 : i32
    %c0_i32_0 = arith.constant 0 : i32
    %c0_i32_1 = arith.constant 0 : i32
    return %c0_i32, %c0_i32_0 : i32, i32
  }
  func.func @transform_4(%arg0: i32) -> (i32, i32) {
    %c0_i32 = arith.constant 0 : i32
    %c0_i32_0 = arith.constant 0 : i32
    return %arg0, %c0_i32 : i32, i32
  }
}

</mosaic_0001>

<llo_original>
// kernel: tpu_custom_call.1
$region0: #{tpu_custom_call.1}
  #allocation0 [shape = 'u32[]', space=smem, size = 0x4, offset = 0x4, fixed_abs, tag = 'smem constant byte address 0x4 - core index']
  #allocation1 [shape = 'u32[144,128]{1,0:T(1,128)}', space=vmem, size = 0x12000, scoped, tag = 'internal scratch']
  %s0 = inlined_call_operand.hbm [shape: f32[512,256], index: 0, kind: input, shape index: {}]
  %s1 = inlined_call_operand.vmem [shape: bf16[256,64], index: 1, kind: input, shape index: {}]
  %s2 = inlined_call_operand.vmem [shape: f32[1,64], index: 2, kind: input, shape index: {}]
  %s3 = inlined_call_operand.vmem [shape: bf16[64,192], index: 3, kind: input, shape index: {}]
  %s4 = inlined_call_operand.vmem [shape: bf16[512,192], index: 4, kind: output, shape index: {}]
  %s5 = sld [smem:[#allocation0]]
  $region53: #{tpu_custom_call.1} parent=0
    _
  %s7 = ssub.s32 1, %s5
  %s8 = scalar_select 0, %s7, %s5
  $region1: #{tpu_custom_call.1} parent=0
    #allocation2 [shape = 'u8[524288]{0}', space=vmem, size = 0x80000, scoped, tag = 'input window, operand 0']
    #allocation3 [shape = 's32[2]{0}', space=sflag, size = 0x8, scoped, tag = 'scoped memory for tpu_custom_call.1']
    %9 = vsyncpa [#allocation3], 0
    %s10 = scalar_lea.sflag [#allocation3], 1
    %11 = vsyncpa %s10, 0
    loop: start=0, step=1, limit=4
    $region2: #{tpu_custom_call.1} parent=1 // loop_pre_header
      _
    $region3: #{tpu_custom_call.1} parent=1 // loop_header
      %s13 = sphi 0, %s17
      %p14 = scmp.ge.s32.totalorder %s13, 4
      %s23 = sphi 0, %s25
      %s26 = sphi 0, %s23
      %s27 = sphi 0, %s26
      %s43 = sphi 0, %s27
      %s47 = sphi 0, %s47
      %s49 = sphi 0, %s47
      %s50 = sphi 0, %s49
      %s64 = sphi 0, %s50
      %s68 = sphi 0, %s68
      %s70 = sphi 0, %s68
      %s71 = sphi 0, %s70
      %s85 = sphi 0, %s71
      %s89 = sphi 0, %s89
      %s91 = sphi 0, %s89
      %s92 = sphi 0, %s91
      %s106 = sphi 0, %s92
      %s112 = sphi 0, %s114
      %s115 = sphi 0, %s112
      %s116 = sphi 0, %s115
      %s132 = sphi 0, %s116
    $region4: #{tpu_custom_call.1} parent=1 // loop_header_branch
      %16 = sbr.rel (%p14) target = $region8
    $region5: #{tpu_custom_call.1} parent=1 // loop_body
      %s18 = ssub.s32 %s13, 1
      %s19 = ssub.s32 %s13, 2
      %s20 = sadd.s32 %s13, 1
      %s21 = ssub.s32 %s13, %s20
      %p22 = scmp.eq.s32.totalorder %s21, 0
      %s24 = sadd.s32 %s23, 1
      %s25 = scalar_select %p22, %s23, %s24
      %p28 = pneg %p22
      %p29 = scmp.eq.s32.totalorder %s13, 1
      %p30 = por %p28, %p29
      %p31 = scmp.ne.s32.totalorder %s23, %s26
      %p32 = scmp.eq.s32.totalorder %s13, 0
      %p33 = por %p31, %p32
      %p34 = scmp.ne.s32.totalorder %s23, %s26
      %p35 = scmp.eq.s32.totalorder %s18, 1
      %p36 = por %p34, %p35
      %p37 = scmp.ne.s32.totalorder %s26, %s27
      %p38 = scmp.eq.s32.totalorder %s18, 0
      %p39 = por %p37, %p38
      %p40 = scmp.ne.s32.totalorder %s26, %s27
      %p41 = scmp.eq.s32.totalorder %s19, 1
      %p42 = por %p40, %p41
      %p44 = scmp.ne.s32.totalorder %s27, %s43
      %p45 = scmp.eq.s32.totalorder %s19, 0
      %p46 = por %p44, %p45
      %s48 = sadd.s32 %s47, 1
      %p51 = scmp.eq.s32.totalorder %s13, 1
      %p52 = scmp.ne.s32.totalorder %s47, %s49
      %p53 = scmp.eq.s32.totalorder %s13, 0
      %p54 = por %p52, %p53
      %p55 = scmp.ne.s32.totalorder %s47, %s49
      %p56 = scmp.eq.s32.totalorder %s18, 1
      %p57 = por %p55, %p56
      %p58 = scmp.ne.s32.totalorder %s49, %s50
      %p59 = scmp.eq.s32.totalorder %s18, 0
      %p60 = por %p58, %p59
      %p61 = scmp.ne.s32.totalorder %s49, %s50
      %p62 = scmp.eq.s32.totalorder %s19, 1
      %p63 = por %p61, %p62
      %p65 = scmp.ne.s32.totalorder %s50, %s64
      %p66 = scmp.eq.s32.totalorder %s19, 0
      %p67 = por %p65, %p66
      %s69 = sadd.s32 %s68, 1
      %p72 = scmp.eq.s32.totalorder %s13, 1
      %p73 = scmp.ne.s32.totalorder %s68, %s70
      %p74 = scmp.eq.s32.totalorder %s13, 0
      %p75 = por %p73, %p74
      %p76 = scmp.ne.s32.totalorder %s68, %s70
      %p77 = scmp.eq.s32.totalorder %s18, 1
      %p78 = por %p76, %p77
      %p79 = scmp.ne.s32.totalorder %s70, %s71
      %p80 = scmp.eq.s32.totalorder %s18, 0
      %p81 = por %p79, %p80
      %p82 = scmp.ne.s32.totalorder %s70, %s71
      %p83 = scmp.eq.s32.totalorder %s19, 1
      %p84 = por %p82, %p83
      %p86 = scmp.ne.s32.totalorder %s71, %s85
      %p87 = scmp.eq.s32.totalorder %s19, 0
      %p88 = por %p86, %p87
      %s90 = sadd.s32 %s89, 1
      %p93 = scmp.eq.s32.totalorder %s13, 1
      %p94 = scmp.ne.s32.totalorder %s89, %s91
      %p95 = scmp.eq.s32.totalorder %s13, 0
      %p96 = por %p94, %p95
      %p97 = scmp.ne.s32.totalorder %s89, %s91
      %p98 = scmp.eq.s32.totalorder %s18, 1
      %p99 = por %p97, %p98
      %p100 = scmp.ne.s32.totalorder %s91, %s92
      %p101 = scmp.eq.s32.totalorder %s18, 0
      %p102 = por %p100, %p101
      %p103 = scmp.ne.s32.totalorder %s91, %s92
      %p104 = scmp.eq.s32.totalorder %s19, 1
      %p105 = por %p103, %p104
      %p107 = scmp.ne.s32.totalorder %s92, %s106
      %p108 = scmp.eq.s32.totalorder %s19, 0
      %p109 = por %p107, %p108
      %s110 = ssub.s32 %s13, %s20
      %p111 = scmp.eq.s32.totalorder %s110, 0
      %s113 = sadd.s32 %s112, 1
      %s114 = scalar_select %p111, %s112, %s113
      %p117 = pneg %p111
      %p118 = scmp.eq.s32.totalorder %s13, 1
      %p119 = por %p117, %p118
      %p120 = scmp.ne.s32.totalorder %s112, %s115
      %p121 = scmp.eq.s32.totalorder %s13, 0
      %p122 = por %p120, %p121
      %p123 = scmp.ne.s32.totalorder %s112, %s115
      %p124 = scmp.eq.s32.totalorder %s18, 1
      %p125 = por %p123, %p124
      %p126 = scmp.ne.s32.totalorder %s115, %s116
      %p127 = scmp.eq.s32.totalorder %s18, 0
      %p128 = por %p126, %p127
      %p129 = scmp.ne.s32.totalorder %s115, %s116
      %p130 = scmp.eq.s32.totalorder %s19, 1
      %p131 = por %p129, %p130
      %p133 = scmp.ne.s32.totalorder %s116, %s132
      %p134 = scmp.eq.s32.totalorder %s19, 0
      %p135 = por %p133, %p134
      %p136 = scmp.le.s32.totalorder 1, %s13
      %p137 = scmp.lt.s32.totalorder %s13, 3
      %p138 = pnand %p136, %p137
      %p139 = pneg %p138
      // Predicated region
      $region9: #{tpu_custom_call.1} parent=5 // pred_check
        _
      $region10: #{tpu_custom_call.1} parent=5 // pred_check_branch
        %141 = sbr.rel (%p138) target = $region12
      $region11: #{tpu_custom_call.1} parent=5 // pred_region
        %s142 = ssub.s32 %s13, 1
        // Predicated region
        $region13: #{tpu_custom_call.1} parent=11 // pred_check
          %p143 = pneg %p60
        $region14: #{tpu_custom_call.1} parent=11 // pred_check_branch
          %145 = sbr.rel (%p143) target = $region16
        $region15: #{tpu_custom_call.1} parent=11 // pred_region
          _
        $region16: #{tpu_custom_call.1} parent=11 // pred_fallthru
          _
        // Predicated region
        $region17: #{tpu_custom_call.1} parent=11 // pred_check
          %p146 = pneg %p81
        $region18: #{tpu_custom_call.1} parent=11 // pred_check_branch
          %148 = sbr.rel (%p146) target = $region20
        $region19: #{tpu_custom_call.1} parent=11 // pred_region
          _
        $region20: #{tpu_custom_call.1} parent=11 // pred_fallthru
          _
        // Predicated region
        $region21: #{tpu_custom_call.1} parent=11 // pred_check
          %p149 = pneg %p102
        $region22: #{tpu_custom_call.1} parent=11 // pred_check_branch
          %151 = sbr.rel (%p149) target = $region24
        $region23: #{tpu_custom_call.1} parent=11 // pred_region
          _
        $region24: #{tpu_custom_call.1} parent=11 // pred_fallthru
          _
      $region12: #{tpu_custom_call.1} parent=5 // pred_fallthru
        _
      %p152 = scmp.lt.s32.totalorder %s13, 2
      // Predicated region
      $region25: #{tpu_custom_call.1} parent=5 // pred_check
        %p153 = pneg %p152
      $region26: #{tpu_custom_call.1} parent=5 // pred_check_branch
        %155 = sbr.rel (%p153) target = $region28
      $region27: #{tpu_custom_call.1} parent=5 // pred_region
        // Predicated region
        $region29: #{tpu_custom_call.1} parent=27 // pred_check
          %p156 = pneg %p33
        $region30: #{tpu_custom_call.1} parent=27 // pred_check_branch
          %158 = sbr.rel (%p156) target = $region32
        $region31: #{tpu_custom_call.1} parent=27 // pred_region
          %s159 = sand.u32 %s23, 1
          %s160 = scalar_lea.sflag [#allocation3], %s159
          %s161 = sand.u32 %s23, 1
          %s162 = smul.addr %s161, 512
          %s163 = scalar_lea.vmem [#allocation2], %s162
          %s164 = smul.u32 32, %s13
          %s166 = ssub.s32 8192, 8192
          %167 = vsyncadd %s160, %s166
          %s168 = smul.addr %s164, 2
          %s169 = smul.addr %s168, 128
          %s170 = scalar_lea.hbm %s0, %s169
          %s171 = sshll.u32 %s163, 4
          %s172 = int_to_ptr.vmem [resolvable:$true] %s171
          %177 = dma.hbm_to_vmem [thread:$0]  %s170, 8192, %s172, %s160, 256, 256, 16
        $region32: #{tpu_custom_call.1} parent=27 // pred_fallthru
          _
      $region28: #{tpu_custom_call.1} parent=5 // pred_fallthru
        _
      %p178 = scmp.le.s32.totalorder 1, %s13
      %p179 = scmp.lt.s32.totalorder %s13, 3
      %p180 = pnand %p178, %p179
      %p181 = pneg %p180
      // Predicated region
      $region33: #{tpu_custom_call.1} parent=5 // pred_check
        _
      $region34: #{tpu_custom_call.1} parent=5 // pred_check_branch
        %183 = sbr.rel (%p180) target = $region36
      $region35: #{tpu_custom_call.1} parent=5 // pred_region
        %s184 = ssub.s32 %s13, 1
        %s185 = sand.u32 %s26, 1
        %s186 = scalar_lea.sflag [#allocation3], %s185
        %s187 = sand.u32 %s26, 1
        %s188 = smul.addr %s187, 512
        %s189 = scalar_lea.vmem [#allocation2], %s188
        // Predicated region
        $region37: #{tpu_custom_call.1} parent=35 // pred_check
          %p190 = pneg %p39
        $region38: #{tpu_custom_call.1} parent=35 // pred_check_branch
          %192 = sbr.rel (%p190) target = $region40
        $region39: #{tpu_custom_call.1} parent=35 // pred_region
          %193 = dma.done %s186, 8192
        $region40: #{tpu_custom_call.1} parent=35 // pred_fallthru
          _
        %s194 = sand.u32 %s26, 1
        %s195 = scalar_lea.sflag [#allocation3], %s194
        %s196 = sand.u32 %s26, 1
        %s197 = smul.addr %s196, 512
        %s198 = scalar_lea.vmem [#allocation2], %s197
        %p199 = pneg %p39
        %p200 = pneg %p36
        %p201 = pneg %p60
        %p202 = pneg %p57
        %p203 = pneg %p81
        %p204 = pneg %p78
        %p205 = pneg %p102
        %p206 = pneg %p99
        %p207 = pneg %p128
        %p208 = pneg %p125
        %s209 = smul.u32 32, %s18
        %p210 = scmp.lt.s32.totalorder %s209, 63
        %s211 = scalar_select %p210, %s209, 63
        %s212 = smul.addr %s211, 2
        %s213 = smul.addr %s212, 4
        %s214 = scalar_lea.vmem %s4, %s213
        %s215 = smul.u32 32, %s18
        %s216 = smul.u32 32, %s18
        %p217 = scmp.lt.s32.totalorder %s216, 63
        %s218 = scalar_select %p217, %s216, 63
        %s219 = smul.addr %s218, 2
        %s220 = smul.addr %s219, 4
        %s221 = scalar_lea.vmem %s4, %s220
        %s222 = smul.u32 32, %s18
        %v224 = vld [vmem:[%s189] sm:$0xff]
        %v225 = vld [vmem:[%s189 + $0x8] sm:$0xff]
        %v226 = vld [vmem:[%s189 + $0x10] sm:$0xff]
        %v227 = vld [vmem:[%s189 + $0x18] sm:$0xff]
        %v228 = vld [vmem:[%s189 + $0x20] sm:$0xff]
        %v229 = vld [vmem:[%s189 + $0x28] sm:$0xff]
        %v230 = vld [vmem:[%s189 + $0x30] sm:$0xff]
        %v231 = vld [vmem:[%s189 + $0x38] sm:$0xff]
        %v232 = vld [vmem:[%s189 + $0x40] sm:$0xff]
        %v233 = vld [vmem:[%s189 + $0x48] sm:$0xff]
        %v234 = vld [vmem:[%s189 + $0x50] sm:$0xff]
        %v235 = vld [vmem:[%s189 + $0x58] sm:$0xff]
        %v236 = vld [vmem:[%s189 + $0x60] sm:$0xff]
        %v237 = vld [vmem:[%s189 + $0x68] sm:$0xff]
        %v238 = vld [vmem:[%s189 + $0x70] sm:$0xff]
        %v239 = vld [vmem:[%s189 + $0x78] sm:$0xff]
        %v240 = vld [vmem:[%s189 + $0x80] sm:$0xff]
        %v241 = vld [vmem:[%s189 + $0x88] sm:$0xff]
        %v242 = vld [vmem:[%s189 + $0x90] sm:$0xff]
        %v243 = vld [vmem:[%s189 + $0x98] sm:$0xff]
        %v244 = vld [vmem:[%s189 + $0xa0] sm:$0xff]
        %v245 = vld [vmem:[%s189 + $0xa8] sm:$0xff]
        %v246 = vld [vmem:[%s189 + $0xb0] sm:$0xff]
        %v247 = vld [vmem:[%s189 + $0xb8] sm:$0xff]
        %v248 = vld [vmem:[%s189 + $0xc0] sm:$0xff]
        %v249 = vld [vmem:[%s189 + $0xc8] sm:$0xff]
        %v250 = vld [vmem:[%s189 + $0xd0] sm:$0xff]
        %v251 = vld [vmem:[%s189 + $0xd8] sm:$0xff]
        %v252 = vld [vmem:[%s189 + $0xe0] sm:$0xff]
        %v253 = vld [vmem:[%s189 + $0xe8] sm:$0xff]
        %v254 = vld [vmem:[%s189 + $0xf0] sm:$0xff]
        %v255 = vld [vmem:[%s189 + $0xf8] sm:$0xff]
        %v256 = vld [vmem:[%s189 + $0x100] sm:$0xff]
        %v257 = vld [vmem:[%s189 + $0x108] sm:$0xff]
        %v258 = vld [vmem:[%s189 + $0x110] sm:$0xff]
        %v259 = vld [vmem:[%s189 + $0x118] sm:$0xff]
        %v260 = vld [vmem:[%s189 + $0x120] sm:$0xff]
        %v261 = vld [vmem:[%s189 + $0x128] sm:$0xff]
        %v262 = vld [vmem:[%s189 + $0x130] sm:$0xff]
        %v263 = vld [vmem:[%s189 + $0x138] sm:$0xff]
        %v264 = vld [vmem:[%s189 + $0x140] sm:$0xff]
        %v265 = vld [vmem:[%s189 + $0x148] sm:$0xff]
        %v266 = vld [vmem:[%s189 + $0x150] sm:$0xff]
        %v267 = vld [vmem:[%s189 + $0x158] sm:$0xff]
        %v268 = vld [vmem:[%s189 + $0x160] sm:$0xff]
        %v269 = vld [vmem:[%s189 + $0x168] sm:$0xff]
        %v270 = vld [vmem:[%s189 + $0x170] sm:$0xff]
        %v271 = vld [vmem:[%s189 + $0x178] sm:$0xff]
        %v272 = vld [vmem:[%s189 + $0x180] sm:$0xff]
        %v273 = vld [vmem:[%s189 + $0x188] sm:$0xff]
        %v274 = vld [vmem:[%s189 + $0x190] sm:$0xff]
        %v275 = vld [vmem:[%s189 + $0x198] sm:$0xff]
        %v276 = vld [vmem:[%s189 + $0x1a0] sm:$0xff]
        %v277 = vld [vmem:[%s189 + $0x1a8] sm:$0xff]
        %v278 = vld [vmem:[%s189 + $0x1b0] sm:$0xff]
        %v279 = vld [vmem:[%s189 + $0x1b8] sm:$0xff]
        %v280 = vld [vmem:[%s189 + $0x1c0] sm:$0xff]
        %v281 = vld [vmem:[%s189 + $0x1c8] sm:$0xff]
        %v282 = vld [vmem:[%s189 + $0x1d0] sm:$0xff]
        %v283 = vld [vmem:[%s189 + $0x1d8] sm:$0xff]
        %v284 = vld [vmem:[%s189 + $0x1e0] sm:$0xff]
        %v285 = vld [vmem:[%s189 + $0x1e8] sm:$0xff]
        %v286 = vld [vmem:[%s189 + $0x1f0] sm:$0xff]
        %v287 = vld [vmem:[%s189 + $0x1f8] sm:$0xff]
        %v288 = vpack.c.bf16 %v226, %v224
        %v289 = vpack.c.bf16 %v227, %v225
        %v290 = vpack.c.bf16 %v230, %v228
        %v291 = vpack.c.bf16 %v231, %v229
        %v292 = vpack.c.bf16 %v234, %v232
        %v293 = vpack.c.bf16 %v235, %v233
        %v294 = vpack.c.bf16 %v238, %v236
        %v295 = vpack.c.bf16 %v239, %v237
        %v296 = vpack.c.bf16 %v242, %v240
        %v297 = vpack.c.bf16 %v243, %v241
        %v298 = vpack.c.bf16 %v246, %v244
        %v299 = vpack.c.bf16 %v247, %v245
        %v300 = vpack.c.bf16 %v250, %v248
        %v301 = vpack.c.bf16 %v251, %v249
        %v302 = vpack.c.bf16 %v254, %v252
        %v303 = vpack.c.bf16 %v255, %v253
        %v304 = vpack.c.bf16 %v258, %v256
        %v305 = vpack.c.bf16 %v259, %v257
        %v306 = vpack.c.bf16 %v262, %v260
        %v307 = vpack.c.bf16 %v263, %v261
        %v308 = vpack.c.bf16 %v266, %v264
        %v309 = vpack.c.bf16 %v267, %v265
        %v310 = vpack.c.bf16 %v270, %v268
        %v311 = vpack.c.bf16 %v271, %v269
        %v312 = vpack.c.bf16 %v274, %v272
        %v313 = vpack.c.bf16 %v275, %v273
        %v314 = vpack.c.bf16 %v278, %v276
        %v315 = vpack.c.bf16 %v279, %v277
        %v316 = vpack.c.bf16 %v282, %v280
        %v317 = vpack.c.bf16 %v283, %v281
        %v318 = vpack.c.bf16 %v286, %v284
        %v319 = vpack.c.bf16 %v287, %v285
        %v320 = vld [vmem:[%s1] sm:$0xf]
        %v321 = vld [vmem:[%s1 + $0x4] sm:$0xf]
        %v322 = vld [vmem:[%s1 + $0x8] sm:$0xf]
        %v323 = vld [vmem:[%s1 + $0xc] sm:$0xf]
        %v324 = vld [vmem:[%s1 + $0x10] sm:$0xf]
        %v325 = vld [vmem:[%s1 + $0x14] sm:$0xf]
        %v326 = vld [vmem:[%s1 + $0x18] sm:$0xf]
        %v327 = vld [vmem:[%s1 + $0x1c] sm:$0xf]
        %v328 = vld [vmem:[%s1 + $0x20] sm:$0xf]
        %v329 = vld [vmem:[%s1 + $0x24] sm:$0xf]
        %v330 = vld [vmem:[%s1 + $0x28] sm:$0xf]
        %v331 = vld [vmem:[%s1 + $0x2c] sm:$0xf]
        %v332 = vld [vmem:[%s1 + $0x30] sm:$0xf]
        %v333 = vld [vmem:[%s1 + $0x34] sm:$0xf]
        %v334 = vld [vmem:[%s1 + $0x38] sm:$0xf]
        %v335 = vld [vmem:[%s1 + $0x3c] sm:$0xf]
        %v336 = vld [vmem:[%s1 + $0x40] sm:$0xf]
        %v337 = vld [vmem:[%s1 + $0x44] sm:$0xf]
        %v338 = vld [vmem:[%s1 + $0x48] sm:$0xf]
        %v339 = vld [vmem:[%s1 + $0x4c] sm:$0xf]
        %v340 = vld [vmem:[%s1 + $0x50] sm:$0xf]
        %v341 = vld [vmem:[%s1 + $0x54] sm:$0xf]
        %v342 = vld [vmem:[%s1 + $0x58] sm:$0xf]
        %v343 = vld [vmem:[%s1 + $0x5c] sm:$0xf]
        %v344 = vld [vmem:[%s1 + $0x60] sm:$0xf]
        %v345 = vld [vmem:[%s1 + $0x64] sm:$0xf]
        %v346 = vld [vmem:[%s1 + $0x68] sm:$0xf]
        %v347 = vld [vmem:[%s1 + $0x6c] sm:$0xf]
        %v348 = vld [vmem:[%s1 + $0x70] sm:$0xf]
        %v349 = vld [vmem:[%s1 + $0x74] sm:$0xf]
        %v350 = vld [vmem:[%s1 + $0x78] sm:$0xf]
        %v351 = vld [vmem:[%s1 + $0x7c] sm:$0xf]
        %v352 = vld [vmem:[%s2] sm:$0x1]
        %v354 = vlaneseq
        %v355 = vshrl.u32 %v354, 7
        %v356 = vsub.s32 0, %v355
        %v357 = vrot.slane %v352, %v356
        %v391 = vunpack.c.l.b16 %v320
        %v392 = vunpack.c.l.b16 %v321
        %v393 = vunpack.c.l.b16 %v322
        %v394 = vunpack.c.l.b16 %v323
        %v395 = vunpack.c.l.b16 %v324
        %v396 = vunpack.c.l.b16 %v325
        %v397 = vunpack.c.l.b16 %v326
        %v398 = vunpack.c.l.b16 %v327
        %v399 = vunpack.c.l.b16 %v328
        %v400 = vunpack.c.l.b16 %v329
        %v401 = vunpack.c.l.b16 %v330
        %v402 = vunpack.c.l.b16 %v331
        %v403 = vunpack.c.l.b16 %v332
        %v404 = vunpack.c.l.b16 %v333
        %v405 = vunpack.c.l.b16 %v334
        %v406 = vunpack.c.l.b16 %v335
        %v407 = vunpack.c.l.b16 %v336
        %v408 = vunpack.c.l.b16 %v337
        %v409 = vunpack.c.l.b16 %v338
        %v410 = vunpack.c.l.b16 %v339
        %v411 = vunpack.c.l.b16 %v340
        %v412 = vunpack.c.l.b16 %v341
        %v413 = vunpack.c.l.b16 %v342
        %v414 = vunpack.c.l.b16 %v343
        %v415 = vunpack.c.l.b16 %v344
        %v416 = vunpack.c.l.b16 %v345
        %v417 = vunpack.c.l.b16 %v346
        %v418 = vunpack.c.l.b16 %v347
        %v419 = vunpack.c.l.b16 %v348
        %v420 = vunpack.c.l.b16 %v349
        %v421 = vunpack.c.l.b16 %v350
        %v422 = vunpack.c.l.b16 %v351
        %v423 = vpack.c.b16 %v392, %v391
        %v424 = vpack.c.b16 %v394, %v393
        %v425 = vpack.c.b16 %v396, %v395
        %v426 = vpack.c.b16 %v398, %v397
        %v427 = vpack.c.b16 %v400, %v399
        %v428 = vpack.c.b16 %v402, %v401
        %v429 = vpack.c.b16 %v404, %v403
        %v430 = vpack.c.b16 %v406, %v405
        %v431 = vpack.c.b16 %v408, %v407
        %v432 = vpack.c.b16 %v410, %v409
        %v433 = vpack.c.b16 %v412, %v411
        %v434 = vpack.c.b16 %v414, %v413
        %v435 = vpack.c.b16 %v416, %v415
        %v436 = vpack.c.b16 %v418, %v417
        %v437 = vpack.c.b16 %v420, %v419
        %v438 = vpack.c.b16 %v422, %v421
        %455 = vmatprep.subr.bf16.mxu0 0
        %456 = vmatpush1.bf16.msra.mxu0 %v430
        %457 = vmatprep.subr.bf16.mxu0 0
        %458 = vmatpush1.bf16.msra.mxu0 %v429
        %459 = vmatprep.subr.bf16.mxu0 0
        %460 = vmatpush1.bf16.msra.mxu0 %v428
        %461 = vmatprep.subr.bf16.mxu0 0
        %462 = vmatpush1.bf16.msra.mxu0 %v427
        %463 = vmatprep.subr.bf16.mxu0 0
        %464 = vmatpush1.bf16.msra.mxu0 %v426
        %465 = vmatprep.subr.bf16.mxu0 0
        %466 = vmatpush1.bf16.msra.mxu0 %v425
        %467 = vmatprep.subr.bf16.mxu0 0
        %468 = vmatpush1.bf16.msra.mxu0 %v424
        %469 = vmatprep.subr.bf16.mxu0 0
        %470 = vmatpush1.bf16.msra.mxu0 %v423
        %471 = vmatprep.subr.bf16.mxu0 0
        %472 = vmatpush2.bf16.msra.mxu0 %v438
        %473 = vmatprep.subr.bf16.mxu0 0
        %474 = vmatpush2.bf16.msra.mxu0 %v437
        %475 = vmatprep.subr.bf16.mxu0 0
        %476 = vmatpush2.bf16.msra.mxu0 %v436
        %477 = vmatprep.subr.bf16.mxu0 0
        %478 = vmatpush2.bf16.msra.mxu0 %v435
        %479 = vmatprep.subr.bf16.mxu0 0
        %480 = vmatpush2.bf16.msra.mxu0 %v434
        %481 = vmatprep.subr.bf16.mxu0 0
        %482 = vmatpush2.bf16.msra.mxu0 %v433
        %483 = vmatprep.subr.bf16.mxu0 0
        %484 = vmatpush2.bf16.msra.mxu0 %v432
        %485 = vmatprep.subr.bf16.mxu0 0
        %486 = vmatpush2.bf16.msra.mxu0 %v431
        %487 = vmatprep.mubr.bf16.mxu0 %v289
        %488 = vmatmul.mubr.bf16.gmra.mxu0 %v288
        %v489 = vpop.f32.mrf.mxu0
        %v490 = vadd.f32 %v357, %v489
        %v491 = vpop.f32.mrf.mxu0
        %v492 = vpop.f32.mrf.mxu0
        %v493 = vadd.f32 %v357, %v492
        %v494 = vpop.f32.mrf.mxu0
        %495 = vmatprep.mubr.bf16.mxu0 %v291
        %496 = vmatmul.mubr.bf16.gmra.mxu0 %v290
        %v497 = vpop.f32.mrf.mxu0
        %v498 = vadd.f32 %v357, %v497
        %v499 = vpop.f32.mrf.mxu0
        %v500 = vpop.f32.mrf.mxu0
        %v501 = vadd.f32 %v357, %v500
        %v502 = vpop.f32.mrf.mxu0
        %503 = vmatprep.mubr.bf16.mxu0 %v293
        %504 = vmatmul.mubr.bf16.gmra.mxu0 %v292
        %v505 = vpop.f32.mrf.mxu0
        %v506 = vadd.f32 %v357, %v505
        %v507 = vpop.f32.mrf.mxu0
        %v508 = vpop.f32.mrf.mxu0
        %v509 = vadd.f32 %v357, %v508
        %v510 = vpop.f32.mrf.mxu0
        %511 = vmatprep.mubr.bf16.mxu0 %v295
        %512 = vmatmul.mubr.bf16.gmra.mxu0 %v294
        %v513 = vpop.f32.mrf.mxu0
        %v514 = vadd.f32 %v357, %v513
        %v515 = vpop.f32.mrf.mxu0
        %v516 = vpop.f32.mrf.mxu0
        %v517 = vadd.f32 %v357, %v516
        %v518 = vpop.f32.mrf.mxu0
        %519 = vmatprep.mubr.bf16.mxu0 %v297
        %520 = vmatmul.mubr.bf16.gmra.mxu0 %v296
        %v521 = vpop.f32.mrf.mxu0
        %v522 = vadd.f32 %v357, %v521
        %v523 = vpop.f32.mrf.mxu0
        %v524 = vpop.f32.mrf.mxu0
        %v525 = vadd.f32 %v357, %v524
        %v526 = vpop.f32.mrf.mxu0
        %527 = vmatprep.mubr.bf16.mxu0 %v299
        %528 = vmatmul.mubr.bf16.gmra.mxu0 %v298
        %v529 = vpop.f32.mrf.mxu0
        %v530 = vadd.f32 %v357, %v529
        %v531 = vpop.f32.mrf.mxu0
        %v532 = vpop.f32.mrf.mxu0
        %v533 = vadd.f32 %v357, %v532
        %v534 = vpop.f32.mrf.mxu0
        %535 = vmatprep.mubr.bf16.mxu0 %v301
        %536 = vmatmul.mubr.bf16.gmra.mxu0 %v300
        %v537 = vpop.f32.mrf.mxu0
        %v538 = vadd.f32 %v357, %v537
        %v539 = vpop.f32.mrf.mxu0
        %v540 = vpop.f32.mrf.mxu0
        %v541 = vadd.f32 %v357, %v540
        %v542 = vpop.f32.mrf.mxu0
        %543 = vmatprep.mubr.bf16.mxu0 %v303
        %544 = vmatmul.mubr.bf16.gmra.mxu0 %v302
        %v545 = vpop.f32.mrf.mxu0
        %v546 = vadd.f32 %v357, %v545
        %v547 = vpop.f32.mrf.mxu0
        %v548 = vpop.f32.mrf.mxu0
        %v549 = vadd.f32 %v357, %v548
        %v550 = vpop.f32.mrf.mxu0
        %551 = vmatprep.mubr.bf16.mxu0 %v305
        %552 = vmatmul.mubr.bf16.gmra.mxu0 %v304
        %v553 = vpop.f32.mrf.mxu0
        %v554 = vadd.f32 %v357, %v553
        %v555 = vpop.f32.mrf.mxu0
        %v556 = vpop.f32.mrf.mxu0
        %v557 = vadd.f32 %v357, %v556
        %v558 = vpop.f32.mrf.mxu0
        %559 = vmatprep.mubr.bf16.mxu0 %v307
        %560 = vmatmul.mubr.bf16.gmra.mxu0 %v306
        %v561 = vpop.f32.mrf.mxu0
        %v562 = vadd.f32 %v357, %v561
        %v563 = vpop.f32.mrf.mxu0
        %v564 = vpop.f32.mrf.mxu0
        %v565 = vadd.f32 %v357, %v564
        %v566 = vpop.f32.mrf.mxu0
        %567 = vmatprep.mubr.bf16.mxu0 %v309
        %568 = vmatmul.mubr.bf16.gmra.mxu0 %v308
        %v569 = vpop.f32.mrf.mxu0
        %v570 = vadd.f32 %v357, %v569
        %v571 = vpop.f32.mrf.mxu0
        %v572 = vpop.f32.mrf.mxu0
        %v573 = vadd.f32 %v357, %v572
        %v574 = vpop.f32.mrf.mxu0
        %575 = vmatprep.mubr.bf16.mxu0 %v311
        %576 = vmatmul.mubr.bf16.gmra.mxu0 %v310
        %v577 = vpop.f32.mrf.mxu0
        %v578 = vadd.f32 %v357, %v577
        %v579 = vpop.f32.mrf.mxu0
        %v580 = vpop.f32.mrf.mxu0
        %v581 = vadd.f32 %v357, %v580
        %v582 = vpop.f32.mrf.mxu0
        %583 = vmatprep.mubr.bf16.mxu0 %v313
        %584 = vmatmul.mubr.bf16.gmra.mxu0 %v312
        %v585 = vpop.f32.mrf.mxu0
        %v586 = vadd.f32 %v357, %v585
        %v587 = vpop.f32.mrf.mxu0
        %v588 = vpop.f32.mrf.mxu0
        %v589 = vadd.f32 %v357, %v588
        %v590 = vpop.f32.mrf.mxu0
        %591 = vmatprep.mubr.bf16.mxu0 %v315
        %592 = vmatmul.mubr.bf16.gmra.mxu0 %v314
        %v593 = vpop.f32.mrf.mxu0
        %v594 = vadd.f32 %v357, %v593
        %v595 = vpop.f32.mrf.mxu0
        %v596 = vpop.f32.mrf.mxu0
        %v597 = vadd.f32 %v357, %v596
        %v598 = vpop.f32.mrf.mxu0
        %599 = vmatprep.mubr.bf16.mxu0 %v317
        %600 = vmatmul.mubr.bf16.gmra.mxu0 %v316
        %v601 = vpop.f32.mrf.mxu0
        %v602 = vadd.f32 %v357, %v601
        %v603 = vpop.f32.mrf.mxu0
        %v604 = vpop.f32.mrf.mxu0
        %v605 = vadd.f32 %v357, %v604
        %v606 = vpop.f32.mrf.mxu0
        %607 = vmatprep.mubr.bf16.mxu0 %v319
        %608 = vmatmul.mubr.bf16.gmra.mxu0 %v318
        %v609 = vpop.f32.mrf.mxu0
        %v610 = vadd.f32 %v357, %v609
        %v611 = vpop.f32.mrf.mxu0
        %v612 = vpop.f32.mrf.mxu0
        %v613 = vadd.f32 %v357, %v612
        %v614 = vpop.f32.mrf.mxu0
        %615 = vdwg.mxu0
        %v616 = vmax.f32 %v490, 0.0
        %v617 = vmax.f32 %v493, 0.0
        %v618 = vmax.f32 %v498, 0.0
        %v619 = vmax.f32 %v501, 0.0
        %v620 = vmax.f32 %v506, 0.0
        %v621 = vmax.f32 %v509, 0.0
        %v622 = vmax.f32 %v514, 0.0
        %v623 = vmax.f32 %v517, 0.0
        %v624 = vmax.f32 %v522, 0.0
        %v625 = vmax.f32 %v525, 0.0
        %v626 = vmax.f32 %v530, 0.0
        %v627 = vmax.f32 %v533, 0.0
        %v628 = vmax.f32 %v538, 0.0
        %v629 = vmax.f32 %v541, 0.0
        %v630 = vmax.f32 %v546, 0.0
        %v631 = vmax.f32 %v549, 0.0
        %v632 = vmax.f32 %v554, 0.0
        %v633 = vmax.f32 %v557, 0.0
        %v634 = vmax.f32 %v562, 0.0
        %v635 = vmax.f32 %v565, 0.0
        %v636 = vmax.f32 %v570, 0.0
        %v637 = vmax.f32 %v573, 0.0
        %v638 = vmax.f32 %v578, 0.0
        %v639 = vmax.f32 %v581, 0.0
        %v640 = vmax.f32 %v586, 0.0
        %v641 = vmax.f32 %v589, 0.0
        %v642 = vmax.f32 %v594, 0.0
        %v643 = vmax.f32 %v597, 0.0
        %v644 = vmax.f32 %v602, 0.0
        %v645 = vmax.f32 %v605, 0.0
        %v646 = vmax.f32 %v610, 0.0
        %v647 = vmax.f32 %v613, 0.0
        %v648 = vpack.c.bf16 %v617, %v616
        %v649 = vpack.c.bf16 %v619, %v618
        %v650 = vpack.c.bf16 %v621, %v620
        %v651 = vpack.c.bf16 %v623, %v622
        %v652 = vpack.c.bf16 %v625, %v624
        %v653 = vpack.c.bf16 %v627, %v626
        %v654 = vpack.c.bf16 %v629, %v628
        %v655 = vpack.c.bf16 %v631, %v630
        %v656 = vpack.c.bf16 %v633, %v632
        %v657 = vpack.c.bf16 %v635, %v634
        %v658 = vpack.c.bf16 %v637, %v636
        %v659 = vpack.c.bf16 %v639, %v638
        %v660 = vpack.c.bf16 %v641, %v640
        %v661 = vpack.c.bf16 %v643, %v642
        %v662 = vpack.c.bf16 %v645, %v644
        %v663 = vpack.c.bf16 %v647, %v646
        %v664 = vld [vmem:[%s3] sm:$0xff]
        %v665 = vld [vmem:[%s3 + $0x8] sm:$0xff]
        %v666 = vld [vmem:[%s3 + $0x10] sm:$0xff]
        %v667 = vld [vmem:[%s3 + $0x18] sm:$0xff]
        %v668 = vld [vmem:[%s3 + $0x20] sm:$0xff]
        %v669 = vld [vmem:[%s3 + $0x28] sm:$0xff]
        %v670 = vld [vmem:[%s3 + $0x30] sm:$0xff]
        %v671 = vld [vmem:[%s3 + $0x38] sm:$0xff]
        %v680 = vunpack.c.l.b16 %v664
        %v681 = vunpack.c.h.b16 %v664
        %v682 = vunpack.c.l.b16 %v665
        %v683 = vunpack.c.h.b16 %v665
        %v684 = vunpack.c.l.b16 %v666
        %v685 = vunpack.c.h.b16 %v666
        %v686 = vunpack.c.l.b16 %v667
        %v687 = vunpack.c.h.b16 %v667
        %v688 = vunpack.c.l.b16 %v668
        %v689 = vunpack.c.h.b16 %v668
        %v690 = vunpack.c.l.b16 %v669
        %v691 = vunpack.c.h.b16 %v669
        %v692 = vunpack.c.l.b16 %v670
        %v693 = vunpack.c.h.b16 %v670
        %v694 = vunpack.c.l.b16 %v671
        %v695 = vunpack.c.h.b16 %v671
        %v696 = vpack.c.b16 %v682, %v680
        %v697 = vpack.c.b16 %v683, %v681
        %v698 = vpack.c.b16 %v686, %v684
        %v699 = vpack.c.b16 %v687, %v685
        %v700 = vpack.c.b16 %v690, %v688
        %v701 = vpack.c.b16 %v691, %v689
        %v702 = vpack.c.b16 %v694, %v692
        %v703 = vpack.c.b16 %v695, %v693
        %vm712 = vcmask 523264
        %v714 = vsel %vm712, %v648, 0
        %v717 = vsel %vm712, %v649, 0
        %v720 = vsel %vm712, %v650, 0
        %v723 = vsel %vm712, %v651, 0
        %v726 = vsel %vm712, %v652, 0
        %v729 = vsel %vm712, %v653, 0
        %v732 = vsel %vm712, %v654, 0
        %v735 = vsel %vm712, %v655, 0
        %v738 = vsel %vm712, %v656, 0
        %v741 = vsel %vm712, %v657, 0
        %v744 = vsel %vm712, %v658, 0
        %v747 = vsel %vm712, %v659, 0
        %v750 = vsel %vm712, %v660, 0
        %v753 = vsel %vm712, %v661, 0
        %v756 = vsel %vm712, %v662, 0
        %v759 = vsel %vm712, %v663, 0
        %761 = vmatprep.subr.bf16.mxu0 0
        %762 = vmatpush1.bf16.msra.mxu0 0
        %763 = vmatprep.subr.bf16.mxu0 0
        %764 = vmatpush1.bf16.msra.mxu0 0
        %765 = vmatprep.subr.bf16.mxu0 0
        %766 = vmatpush1.bf16.msra.mxu0 0
        %767 = vmatprep.subr.bf16.mxu0 0
        %768 = vmatpush1.bf16.msra.mxu0 0
        %769 = vmatprep.subr.bf16.mxu0 %v703
        %770 = vmatpush1.bf16.msra.mxu0 %v702
        %771 = vmatprep.subr.bf16.mxu0 %v701
        %772 = vmatpush1.bf16.msra.mxu0 %v700
        %773 = vmatprep.subr.bf16.mxu0 %v699
        %774 = vmatpush1.bf16.msra.mxu0 %v698
        %775 = vmatprep.subr.bf16.mxu0 %v697
        %776 = vmatpush1.bf16.msra.mxu0 %v696
        %777 = vmatprep.subr.bf16.mxu0 0
        %778 = vmatpush2.bf16.msra.mxu0 0
        %779 = vmatprep.subr.bf16.mxu0 0
        %780 = vmatpush2.bf16.msra.mxu0 0
        %781 = vmatprep.subr.bf16.mxu0 0
        %782 = vmatpush2.bf16.msra.mxu0 0
        %783 = vmatprep.subr.bf16.mxu0 0
        %784 = vmatpush2.bf16.msra.mxu0 0
        %785 = vmatprep.subr.bf16.mxu0 0
        %786 = vmatpush2.bf16.msra.mxu0 0
        %787 = vmatprep.subr.bf16.mxu0 0
        %788 = vmatpush2.bf16.msra.mxu0 0
        %789 = vmatprep.subr.bf16.mxu0 0
        %790 = vmatpush2.bf16.msra.mxu0 0
        %791 = vmatprep.subr.bf16.mxu0 0
        %792 = vmatpush2.bf16.msra.mxu0 0
        %793 = vmatprep.mubr.bf16.mxu0 0
        %794 = vmatmul.mubr.bf16.gmra.mxu0 %v714
        %v795 = vpop.f32.mrf.mxu0
        %v796 = vadd.f32 0.0, %v795
        %v797 = vpop.f32.mrf.mxu0
        %v798 = vadd.f32 0.0, %v797
        %v799 = vpop.f32.mrf.mxu0
        %v800 = vadd.f32 0.0, %v799
        %v801 = vpop.f32.mrf.mxu0
        %v802 = vadd.f32 0.0, %v801
        %803 = vmatprep.mubr.bf16.mxu0 0
        %804 = vmatmul.mubr.bf16.gmra.mxu0 %v717
        %v805 = vpop.f32.mrf.mxu0
        %v806 = vadd.f32 0.0, %v805
        %v807 = vpop.f32.mrf.mxu0
        %v808 = vadd.f32 0.0, %v807
        %v809 = vpop.f32.mrf.mxu0
        %v810 = vadd.f32 0.0, %v809
        %v811 = vpop.f32.mrf.mxu0
        %v812 = vadd.f32 0.0, %v811
        %813 = vmatprep.mubr.bf16.mxu0 0
        %814 = vmatmul.mubr.bf16.gmra.mxu0 %v720
        %v815 = vpop.f32.mrf.mxu0
        %v816 = vadd.f32 0.0, %v815
        %v817 = vpop.f32.mrf.mxu0
        %v818 = vadd.f32 0.0, %v817
        %v819 = vpop.f32.mrf.mxu0
        %v820 = vadd.f32 0.0, %v819
        %v821 = vpop.f32.mrf.mxu0
        %v822 = vadd.f32 0.0, %v821
        %823 = vmatprep.mubr.bf16.mxu0 0
        %824 = vmatmul.mubr.bf16.gmra.mxu0 %v723
        %v825 = vpop.f32.mrf.mxu0
        %v826 = vadd.f32 0.0, %v825
        %v827 = vpop.f32.mrf.mxu0
        %v828 = vadd.f32 0.0, %v827
        %v829 = vpop.f32.mrf.mxu0
        %v830 = vadd.f32 0.0, %v829
        %v831 = vpop.f32.mrf.mxu0
        %v832 = vadd.f32 0.0, %v831
        %833 = vmatprep.mubr.bf16.mxu0 0
        %834 = vmatmul.mubr.bf16.gmra.mxu0 %v726
        %v835 = vpop.f32.mrf.mxu0
        %v836 = vadd.f32 0.0, %v835
        %v837 = vpop.f32.mrf.mxu0
        %v838 = vadd.f32 0.0, %v837
        %v839 = vpop.f32.mrf.mxu0
        %v840 = vadd.f32 0.0, %v839
        %v841 = vpop.f32.mrf.mxu0
        %v842 = vadd.f32 0.0, %v841
        %843 = vmatprep.mubr.bf16.mxu0 0
        %844 = vmatmul.mubr.bf16.gmra.mxu0 %v729
        %v845 = vpop.f32.mrf.mxu0
        %v846 = vadd.f32 0.0, %v845
        %v847 = vpop.f32.mrf.mxu0
        %v848 = vadd.f32 0.0, %v847
        %v849 = vpop.f32.mrf.mxu0
        %v850 = vadd.f32 0.0, %v849
        %v851 = vpop.f32.mrf.mxu0
        %v852 = vadd.f32 0.0, %v851
        %853 = vmatprep.mubr.bf16.mxu0 0
        %854 = vmatmul.mubr.bf16.gmra.mxu0 %v732
        %v855 = vpop.f32.mrf.mxu0
        %v856 = vadd.f32 0.0, %v855
        %v857 = vpop.f32.mrf.mxu0
        %v858 = vadd.f32 0.0, %v857
        %v859 = vpop.f32.mrf.mxu0
        %v860 = vadd.f32 0.0, %v859
        %v861 = vpop.f32.mrf.mxu0
        %v862 = vadd.f32 0.0, %v861
        %863 = vmatprep.mubr.bf16.mxu0 0
        %864 = vmatmul.mubr.bf16.gmra.mxu0 %v735
        %v865 = vpop.f32.mrf.mxu0
        %v866 = vadd.f32 0.0, %v865
        %v867 = vpop.f32.mrf.mxu0
        %v868 = vadd.f32 0.0, %v867
        %v869 = vpop.f32.mrf.mxu0
        %v870 = vadd.f32 0.0, %v869
        %v871 = vpop.f32.mrf.mxu0
        %v872 = vadd.f32 0.0, %v871
        %873 = vmatprep.mubr.bf16.mxu0 0
        %874 = vmatmul.mubr.bf16.gmra.mxu0 %v738
        %v875 = vpop.f32.mrf.mxu0
        %v876 = vadd.f32 0.0, %v875
        %v877 = vpop.f32.mrf.mxu0
        %v878 = vadd.f32 0.0, %v877
        %v879 = vpop.f32.mrf.mxu0
        %v880 = vadd.f32 0.0, %v879
        %v881 = vpop.f32.mrf.mxu0
        %v882 = vadd.f32 0.0, %v881
        %883 = vmatprep.mubr.bf16.mxu0 0
        %884 = vmatmul.mubr.bf16.gmra.mxu0 %v741
        %v885 = vpop.f32.mrf.mxu0
        %v886 = vadd.f32 0.0, %v885
        %v887 = vpop.f32.mrf.mxu0
        %v888 = vadd.f32 0.0, %v887
        %v889 = vpop.f32.mrf.mxu0
        %v890 = vadd.f32 0.0, %v889
        %v891 = vpop.f32.mrf.mxu0
        %v892 = vadd.f32 0.0, %v891
        %893 = vmatprep.mubr.bf16.mxu0 0
        %894 = vmatmul.mubr.bf16.gmra.mxu0 %v744
        %v895 = vpop.f32.mrf.mxu0
        %v896 = vadd.f32 0.0, %v895
        %v897 = vpop.f32.mrf.mxu0
        %v898 = vadd.f32 0.0, %v897
        %v899 = vpop.f32.mrf.mxu0
        %v900 = vadd.f32 0.0, %v899
        %v901 = vpop.f32.mrf.mxu0
        %v902 = vadd.f32 0.0, %v901
        %903 = vmatprep.mubr.bf16.mxu0 0
        %904 = vmatmul.mubr.bf16.gmra.mxu0 %v747
        %v905 = vpop.f32.mrf.mxu0
        %v906 = vadd.f32 0.0, %v905
        %v907 = vpop.f32.mrf.mxu0
        %v908 = vadd.f32 0.0, %v907
        %v909 = vpop.f32.mrf.mxu0
        %v910 = vadd.f32 0.0, %v909
        %v911 = vpop.f32.mrf.mxu0
        %v912 = vadd.f32 0.0, %v911
        %913 = vmatprep.mubr.bf16.mxu0 0
        %914 = vmatmul.mubr.bf16.gmra.mxu0 %v750
        %v915 = vpop.f32.mrf.mxu0
        %v916 = vadd.f32 0.0, %v915
        %v917 = vpop.f32.mrf.mxu0
        %v918 = vadd.f32 0.0, %v917
        %v919 = vpop.f32.mrf.mxu0
        %v920 = vadd.f32 0.0, %v919
        %v921 = vpop.f32.mrf.mxu0
        %v922 = vadd.f32 0.0, %v921
        %923 = vmatprep.mubr.bf16.mxu0 0
        %924 = vmatmul.mubr.bf16.gmra.mxu0 %v753
        %v925 = vpop.f32.mrf.mxu0
        %v926 = vadd.f32 0.0, %v925
        %v927 = vpop.f32.mrf.mxu0
        %v928 = vadd.f32 0.0, %v927
        %v929 = vpop.f32.mrf.mxu0
        %v930 = vadd.f32 0.0, %v929
        %v931 = vpop.f32.mrf.mxu0
        %v932 = vadd.f32 0.0, %v931
        %933 = vmatprep.mubr.bf16.mxu0 0
        %934 = vmatmul.mubr.bf16.gmra.mxu0 %v756
        %v935 = vpop.f32.mrf.mxu0
        %v936 = vadd.f32 0.0, %v935
        %v937 = vpop.f32.mrf.mxu0
        %v938 = vadd.f32 0.0, %v937
        %v939 = vpop.f32.mrf.mxu0
        %v940 = vadd.f32 0.0, %v939
        %v941 = vpop.f32.mrf.mxu0
        %v942 = vadd.f32 0.0, %v941
        %943 = vmatprep.mubr.bf16.mxu0 0
        %944 = vmatmul.mubr.bf16.gmra.mxu0 %v759
        %v945 = vpop.f32.mrf.mxu0
        %v946 = vadd.f32 0.0, %v945
        %v947 = vpop.f32.mrf.mxu0
        %v948 = vadd.f32 0.0, %v947
        %v949 = vpop.f32.mrf.mxu0
        %v950 = vadd.f32 0.0, %v949
        %v951 = vpop.f32.mrf.mxu0
        %v952 = vadd.f32 0.0, %v951
        %953 = vdwg.mxu0
        %v954 = vpack.c.bf16 %v800, %v796
        %v955 = vpack.c.bf16 %v802, %v798
        %v956 = vpack.c.bf16 %v810, %v806
        %v957 = vpack.c.bf16 %v812, %v808
        %v958 = vpack.c.bf16 %v820, %v816
        %v959 = vpack.c.bf16 %v822, %v818
        %v960 = vpack.c.bf16 %v830, %v826
        %v961 = vpack.c.bf16 %v832, %v828
        %v962 = vpack.c.bf16 %v840, %v836
        %v963 = vpack.c.bf16 %v842, %v838
        %v964 = vpack.c.bf16 %v850, %v846
        %v965 = vpack.c.bf16 %v852, %v848
        %v966 = vpack.c.bf16 %v860, %v856
        %v967 = vpack.c.bf16 %v862, %v858
        %v968 = vpack.c.bf16 %v870, %v866
        %v969 = vpack.c.bf16 %v872, %v868
        %v970 = vpack.c.bf16 %v880, %v876
        %v971 = vpack.c.bf16 %v882, %v878
        %v972 = vpack.c.bf16 %v890, %v886
        %v973 = vpack.c.bf16 %v892, %v888
        %v974 = vpack.c.bf16 %v900, %v896
        %v975 = vpack.c.bf16 %v902, %v898
        %v976 = vpack.c.bf16 %v910, %v906
        %v977 = vpack.c.bf16 %v912, %v908
        %v978 = vpack.c.bf16 %v920, %v916
        %v979 = vpack.c.bf16 %v922, %v918
        %v980 = vpack.c.bf16 %v930, %v926
        %v981 = vpack.c.bf16 %v932, %v928
        %v982 = vpack.c.bf16 %v940, %v936
        %v983 = vpack.c.bf16 %v942, %v938
        %v984 = vpack.c.bf16 %v950, %v946
        %v985 = vpack.c.bf16 %v952, %v948
        %v1018 = vunpack.c.l.b16 %v954
        %v1019 = vunpack.c.l.b16 %v955
        %v1020 = vunpack.c.h.b16 %v954
        %v1021 = vunpack.c.h.b16 %v955
        %v1022 = vunpack.c.l.b16 %v956
        %v1023 = vunpack.c.l.b16 %v957
        %v1024 = vunpack.c.h.b16 %v956
        %v1025 = vunpack.c.h.b16 %v957
        %v1026 = vunpack.c.l.b16 %v958
        %v1027 = vunpack.c.l.b16 %v959
        %v1028 = vunpack.c.h.b16 %v958
        %v1029 = vunpack.c.h.b16 %v959
        %v1030 = vunpack.c.l.b16 %v960
        %v1031 = vunpack.c.l.b16 %v961
        %v1032 = vunpack.c.h.b16 %v960
        %v1033 = vunpack.c.h.b16 %v961
        %v1034 = vunpack.c.l.b16 %v962
        %v1035 = vunpack.c.l.b16 %v963
        %v1036 = vunpack.c.h.b16 %v962
        %v1037 = vunpack.c.h.b16 %v963
        %v1038 = vunpack.c.l.b16 %v964
        %v1039 = vunpack.c.l.b16 %v965
        %v1040 = vunpack.c.h.b16 %v964
        %v1041 = vunpack.c.h.b16 %v965
        %v1042 = vunpack.c.l.b16 %v966
        %v1043 = vunpack.c.l.b16 %v967
        %v1044 = vunpack.c.h.b16 %v966
        %v1045 = vunpack.c.h.b16 %v967
        %v1046 = vunpack.c.l.b16 %v968
        %v1047 = vunpack.c.l.b16 %v969
        %v1048 = vunpack.c.h.b16 %v968
        %v1049 = vunpack.c.h.b16 %v969
        %v1050 = vunpack.c.l.b16 %v970
        %v1051 = vunpack.c.l.b16 %v971
        %v1052 = vunpack.c.h.b16 %v970
        %v1053 = vunpack.c.h.b16 %v971
        %v1054 = vunpack.c.l.b16 %v972
        %v1055 = vunpack.c.l.b16 %v973
        %v1056 = vunpack.c.h.b16 %v972
        %v1057 = vunpack.c.h.b16 %v973
        %v1058 = vunpack.c.l.b16 %v974
        %v1059 = vunpack.c.l.b16 %v975
        %v1060 = vunpack.c.h.b16 %v974
        %v1061 = vunpack.c.h.b16 %v975
        %v1062 = vunpack.c.l.b16 %v976
        %v1063 = vunpack.c.l.b16 %v977
        %v1064 = vunpack.c.h.b16 %v976
        %v1065 = vunpack.c.h.b16 %v977
        %v1066 = vunpack.c.l.b16 %v978
        %v1067 = vunpack.c.l.b16 %v979
        %v1068 = vunpack.c.h.b16 %v978
        %v1069 = vunpack.c.h.b16 %v979
        %v1070 = vunpack.c.l.b16 %v980
        %v1071 = vunpack.c.l.b16 %v981
        %v1072 = vunpack.c.h.b16 %v980
        %v1073 = vunpack.c.h.b16 %v981
        %v1074 = vunpack.c.l.b16 %v982
        %v1075 = vunpack.c.l.b16 %v983
        %v1076 = vunpack.c.h.b16 %v982
        %v1077 = vunpack.c.h.b16 %v983
        %v1078 = vunpack.c.l.b16 %v984
        %v1079 = vunpack.c.l.b16 %v985
        %v1080 = vunpack.c.h.b16 %v984
        %v1081 = vunpack.c.h.b16 %v985
        %v1082 = vpack.c.b16 %v1019, %v1018
        %v1083 = vpack.c.b16 %v1021, %v1020
        %v1084 = vpack.c.b16 %v1023, %v1022
        %v1085 = vpack.c.b16 %v1025, %v1024
        %v1086 = vpack.c.b16 %v1027, %v1026
        %v1087 = vpack.c.b16 %v1029, %v1028
        %v1088 = vpack.c.b16 %v1031, %v1030
        %v1089 = vpack.c.b16 %v1033, %v1032
        %v1090 = vpack.c.b16 %v1035, %v1034
        %v1091 = vpack.c.b16 %v1037, %v1036
        %v1092 = vpack.c.b16 %v1039, %v1038
        %v1093 = vpack.c.b16 %v1041, %v1040
        %v1094 = vpack.c.b16 %v1043, %v1042
        %v1095 = vpack.c.b16 %v1045, %v1044
        %v1096 = vpack.c.b16 %v1047, %v1046
        %v1097 = vpack.c.b16 %v1049, %v1048
        %v1098 = vpack.c.b16 %v1051, %v1050
        %v1099 = vpack.c.b16 %v1053, %v1052
        %v1100 = vpack.c.b16 %v1055, %v1054
        %v1101 = vpack.c.b16 %v1057, %v1056
        %v1102 = vpack.c.b16 %v1059, %v1058
        %v1103 = vpack.c.b16 %v1061, %v1060
        %v1104 = vpack.c.b16 %v1063, %v1062
        %v1105 = vpack.c.b16 %v1065, %v1064
        %v1106 = vpack.c.b16 %v1067, %v1066
        %v1107 = vpack.c.b16 %v1069, %v1068
        %v1108 = vpack.c.b16 %v1071, %v1070
        %v1109 = vpack.c.b16 %v1073, %v1072
        %v1110 = vpack.c.b16 %v1075, %v1074
        %v1111 = vpack.c.b16 %v1077, %v1076
        %v1112 = vpack.c.b16 %v1079, %v1078
        %v1113 = vpack.c.b16 %v1081, %v1080
        %vm1146 = vcmask 1043456
        %vm1147 = vcmask 523268
        %vm1148 = vmor %vm1147, %vm1146
        %1149 = vst.msk [vmem:[%s221] sm:$0xff] %vm1148, %v1082
        %1150 = vst.msk [vmem:[%s221 + $0x8] sm:$0xff] %vm1148, %v1083
        %1151 = vst.msk [vmem:[%s221 + $0x10] sm:$0xff] %vm1148, %v1084
        %1152 = vst.msk [vmem:[%s221 + $0x18] sm:$0xff] %vm1148, %v1085
        %1153 = vst.msk [vmem:[%s221 + $0x20] sm:$0xff] %vm1148, %v1086
        %1154 = vst.msk [vmem:[%s221 + $0x28] sm:$0xff] %vm1148, %v1087
        %1155 = vst.msk [vmem:[%s221 + $0x30] sm:$0xff] %vm1148, %v1088
        %1156 = vst.msk [vmem:[%s221 + $0x38] sm:$0xff] %vm1148, %v1089
        %1157 = vst.msk [vmem:[%s221 + $0x40] sm:$0xff] %vm1148, %v1090
        %1158 = vst.msk [vmem:[%s221 + $0x48] sm:$0xff] %vm1148, %v1091
        %1159 = vst.msk [vmem:[%s221 + $0x50] sm:$0xff] %vm1148, %v1092
        %1160 = vst.msk [vmem:[%s221 + $0x58] sm:$0xff] %vm1148, %v1093
        %1161 = vst.msk [vmem:[%s221 + $0x60] sm:$0xff] %vm1148, %v1094
        %1162 = vst.msk [vmem:[%s221 + $0x68] sm:$0xff] %vm1148, %v1095
        %1163 = vst.msk [vmem:[%s221 + $0x70] sm:$0xff] %vm1148, %v1096
        %1164 = vst.msk [vmem:[%s221 + $0x78] sm:$0xff] %vm1148, %v1097
        %1165 = vst.msk [vmem:[%s221 + $0x80] sm:$0xff] %vm1148, %v1098
        %1166 = vst.msk [vmem:[%s221 + $0x88] sm:$0xff] %vm1148, %v1099
        %1167 = vst.msk [vmem:[%s221 + $0x90] sm:$0xff] %vm1148, %v1100
        %1168 = vst.msk [vmem:[%s221 + $0x98] sm:$0xff] %vm1148, %v1101
        %1169 = vst.msk [vmem:[%s221 + $0xa0] sm:$0xff] %vm1148, %v1102
        %1170 = vst.msk [vmem:[%s221 + $0xa8] sm:$0xff] %vm1148, %v1103
        %1171 = vst.msk [vmem:[%s221 + $0xb0] sm:$0xff] %vm1148, %v1104
        %1172 = vst.msk [vmem:[%s221 + $0xb8] sm:$0xff] %vm1148, %v1105
        %1173 = vst.msk [vmem:[%s221 + $0xc0] sm:$0xff] %vm1148, %v1106
        %1174 = vst.msk [vmem:[%s221 + $0xc8] sm:$0xff] %vm1148, %v1107
        %1175 = vst.msk [vmem:[%s221 + $0xd0] sm:$0xff] %vm1148, %v1108
        %1176 = vst.msk [vmem:[%s221 + $0xd8] sm:$0xff] %vm1148, %v1109
        %1177 = vst.msk [vmem:[%s221 + $0xe0] sm:$0xff] %vm1148, %v1110
        %1178 = vst.msk [vmem:[%s221 + $0xe8] sm:$0xff] %vm1148, %v1111
        %1179 = vst.msk [vmem:[%s221 + $0xf0] sm:$0xff] %vm1148, %v1112
        %1180 = vst.msk [vmem:[%s221 + $0xf8] sm:$0xff] %vm1148, %v1113
        %s1181 = smul.u32 32, %s18
        %p1182 = scmp.lt.s32.totalorder %s1181, 63
        %s1183 = scalar_select %p1182, %s1181, 63
        %s1184 = smul.addr %s1183, 2
        %s1185 = smul.addr %s1184, 4
        %s1186 = scalar_lea.vmem %s4, %s1185
        // Predicated region
        $region41: #{tpu_custom_call.1} parent=35 // pred_check
          %p1187 = pneg %p125
        $region42: #{tpu_custom_call.1} parent=35 // pred_check_branch
          %1189 = sbr.rel (%p1187) target = $region44
        $region43: #{tpu_custom_call.1} parent=35 // pred_region
          %s1190 = smul.u32 32, %s18
        $region44: #{tpu_custom_call.1} parent=35 // pred_fallthru
          _
      $region36: #{tpu_custom_call.1} parent=5 // pred_fallthru
        _
      %p1191 = scmp.le.s32.totalorder 2, %s13
      // Predicated region
      $region45: #{tpu_custom_call.1} parent=5 // pred_check
        %p1192 = pneg %p1191
      $region46: #{tpu_custom_call.1} parent=5 // pred_check_branch
        %1194 = sbr.rel (%p1192) target = $region48
      $region47: #{tpu_custom_call.1} parent=5 // pred_region
        %s1195 = ssub.s32 %s13, 2
        // Predicated region
        $region49: #{tpu_custom_call.1} parent=47 // pred_check
          %p1196 = pneg %p131
        $region50: #{tpu_custom_call.1} parent=47 // pred_check_branch
          %1198 = sbr.rel (%p1196) target = $region52
        $region51: #{tpu_custom_call.1} parent=47 // pred_region
          %s1199 = smul.u32 32, %s19
          %p1200 = scmp.lt.s32.totalorder %s1199, 63
          %s1201 = scalar_select %p1200, %s1199, 63
          %s1202 = smul.addr %s1201, 2
          %s1203 = smul.addr %s1202, 4
          %s1204 = scalar_lea.vmem %s4, %s1203
        $region52: #{tpu_custom_call.1} parent=47 // pred_fallthru
          _
      $region48: #{tpu_custom_call.1} parent=5 // pred_fallthru
        _
    $region6: #{tpu_custom_call.1} parent=1 // loop_footer
      %s17 = sadd.s32 1, %s13
    $region7: #{tpu_custom_call.1} parent=1 // loop_footer_branch
      %12 = sbr.rel target = $region3
    $region8: #{tpu_custom_call.1} parent=1 // loop_exit
      _
    %1205 = vsyncpa [#allocation3], 1
    %s1206 = scalar_lea.sflag [#allocation3], 1
    %1207 = vsyncpa %s1206, 1

</llo_original>
